<compile_context>
chip_gen: v7x
topology: tpu7x:2x2x1
jax: 0.10.0
libtpu: 0.0.40
codegen_flags: <defaults>
</compile_context>

<pallas_src>
import functools

import jax
import jax.numpy as jnp
from jax.experimental import pallas as pl
from jax.experimental.pallas import tpu as pltpu


def critic_kernel(state_ref, action_ref, slab_ref, w2_ref, o_ref, *,
                  n_obs, n_act, hidden):
    B = state_ref.shape[0]
    s = state_ref[...].astype(jnp.float32)           # (B, n_obs)
    a = action_ref[...].astype(jnp.float32)          # (B, n_act)
    slab = slab_ref[...]                             # (n_obs+n_act+4, H) f32

    r = n_obs + n_act
    w3 = slab[r:r + 1, :]                            # (1, H)
    b1 = slab[r + 1:r + 2, :]                        # (1, H)
    b2 = slab[r + 2:r + 3, :]                        # (1, H)
    b3 = slab[r + 3:r + 4, 0:1]                      # (1, 1)

    # Layer 1 (fused concat): K = n_obs + n_act is degenerate for the MXU, so
    # build h1 with rank-1 broadcast-FMA updates on the VPU, all in f32.
    h1 = jnp.broadcast_to(b1, (B, hidden))
    for k in range(n_obs):                           # static, unrolled
        h1 = h1 + s[:, k:k + 1] * slab[k:k + 1, :]
    for j in range(n_act):
        h1 = h1 + a[:, j:j + 1] * slab[n_obs + j:n_obs + j + 1, :]
    h1 = jnp.maximum(h1, 0.0)

    # Layer 2: 256x256 bf16 MXU matmul, f32 accumulate; bias + relu on the VPU.
    h2 = jnp.dot(h1.astype(jnp.bfloat16), w2_ref[...],
                 preferred_element_type=jnp.float32) + b2
    h2 = jnp.maximum(h2, 0.0)

    # Layer 3 (out_features = 1): VPU multiply + XLU cross-lane sum instead of
    # a lane-sparse N=1 MXU matmul.
    q = jnp.sum(h2 * w3, axis=-1, keepdims=True) + b3    # (B, 1)
    o_ref[...] = q.astype(o_ref.dtype)


def critic_forward(state, action, params):
    """state: (B, n_obs), action: (B, n_act) -> (B, 1) float32."""
    slab, w2 = params
    B, n_obs = state.shape
    n_act = action.shape[1]
    hidden = w2.shape[0]

    flops = 2 * B * ((n_obs + n_act) * hidden + hidden * hidden + hidden)
    bytes_accessed = (int(slab.size) * 4 + int(w2.size) * 2
                      + int(state.size) * state.dtype.itemsize
                      + int(action.size) * action.dtype.itemsize + B * 4)

    kernel = functools.partial(critic_kernel, n_obs=n_obs, n_act=n_act,
                               hidden=hidden)
    vmem = pl.BlockSpec(memory_space=pltpu.MemorySpace.VMEM)
    return pl.pallas_call(
        kernel,
        out_shape=jax.ShapeDtypeStruct((B, 1), jnp.float32),
        in_specs=[vmem] * 4,
        out_specs=vmem,
        cost_estimate=pl.CostEstimate(flops=flops, transcendentals=0,
                                      bytes_accessed=bytes_accessed),
    )(state, action, slab, w2)


def init_params(key, n_obs, n_act, hidden=256):
    """Deterministic init mimicking torch.nn.Linear (uniform +-1/sqrt(fan_in)).

    Returns (slab, w2):
      slab: f32 (n_obs+n_act+4, hidden) packing
            [W1 rows | W3 row | b1 | b2 | b3 (at col 0)]
      w2:   bf16 (hidden, hidden)
    """
    def linear(k, fan_in, fan_out):
        kw, kb = jax.random.split(k)
        bound = 1.0 / jnp.sqrt(float(fan_in))
        w = jax.random.uniform(kw, (fan_in, fan_out), jnp.float32, -bound, bound)
        b = jax.random.uniform(kb, (fan_out,), jnp.float32, -bound, bound)
        return w, b

    k1, k2, k3 = jax.random.split(key, 3)
    w1, b1 = linear(k1, n_obs + n_act, hidden)    # (n_obs+n_act, H), (H,)
    w2, b2 = linear(k2, hidden, hidden)           # (H, H), (H,)
    w3, b3 = linear(k3, hidden, 1)                # (H, 1), (1,)

    b3_row = jnp.zeros((hidden,), jnp.float32).at[0].set(b3[0])
    slab = jnp.concatenate(
        [w1, w3.T, b1[None, :], b2[None, :], b3_row[None, :]], axis=0)
    return slab, w2.astype(jnp.bfloat16)


if __name__ == "__main__":
    # Pendulum-v1: n_observations = 3, n_actions = 1.
    n_obs, n_act, batch = 3, 1, 8

    key = jax.random.PRNGKey(0)
    kp, ks, ka = jax.random.split(key, 3)

    params = init_params(kp, n_obs, n_act)
    state = jax.random.normal(ks, (batch, n_obs), jnp.float32)
    action = jax.random.uniform(ka, (batch, n_act), jnp.float32, -2.0, 2.0)

    q = critic_forward(state, action, params)
    jax.block_until_ready(q)

    # Pure-JAX f32 reference using the same (bf16-rounded W2) weights.
    slab, w2_bf16 = params
    r = n_obs + n_act
    w1 = slab[:r]
    w3 = slab[r:r + 1]
    b1 = slab[r + 1]
    b2 = slab[r + 2]
    b3 = slab[r + 3, 0]
    x = jnp.concatenate([state, action], axis=1)
    h1 = jnp.maximum(x @ w1 + b1, 0.0)
    h2 = jnp.maximum(h1 @ w2_bf16.astype(jnp.float32) + b2, 0.0)
    ref = h2 @ w3.T + b3

    assert q.shape == (batch, 1)
    # Only W2 / the layer-2 matmul operands are bf16 (f32 accumulate), so the
    # tolerance covers just that rounding.
    assert jnp.allclose(q, ref, atol=5e-2, rtol=5e-2), "mismatch vs reference"

    print("KERNEL_OK")
</pallas_src>

<mosaic_0001>
module attributes {stable_mosaic.version = 11 : i64} {
  func.func @critic_kernel(%arg0: memref<8x3xf32, #tpu.memory_space<vmem>>, %arg1: memref<8x1xf32, #tpu.memory_space<vmem>>, %arg2: memref<8x256xf32, #tpu.memory_space<vmem>>, %arg3: memref<256x256xbf16, #tpu.memory_space<vmem>>, %arg4: memref<8x1xf32, #tpu.memory_space<vmem>>) attributes {dimension_semantics = [], scalar_prefetch = 0 : i64, scratch_operands = 0 : i64, tpu.core_type = #tpu.core_type<tc>} {
    %c0 = arith.constant 0 : index
    %c0_0 = arith.constant 0 : index
    %0 = vector.load %arg0[%c0, %c0_0] : memref<8x3xf32, #tpu.memory_space<vmem>>, vector<8x3xf32>
    %c0_1 = arith.constant 0 : index
    %c0_2 = arith.constant 0 : index
    %1 = vector.load %arg1[%c0_1, %c0_2] : memref<8x1xf32, #tpu.memory_space<vmem>>, vector<8x1xf32>
    %c0_3 = arith.constant 0 : index
    %c0_4 = arith.constant 0 : index
    %2 = vector.load %arg2[%c0_3, %c0_4] : memref<8x256xf32, #tpu.memory_space<vmem>>, vector<8x256xf32>
    %3 = vector.extract_strided_slice %2 {offsets = [4, 0], sizes = [1, 256], strides = [1, 1]} : vector<8x256xf32> to vector<1x256xf32>
    %4 = vector.extract_strided_slice %2 {offsets = [5, 0], sizes = [1, 256], strides = [1, 1]} : vector<8x256xf32> to vector<1x256xf32>
    %5 = vector.extract_strided_slice %2 {offsets = [6, 0], sizes = [1, 256], strides = [1, 1]} : vector<8x256xf32> to vector<1x256xf32>
    %6 = vector.extract_strided_slice %2 {offsets = [7, 0], sizes = [1, 1], strides = [1, 1]} : vector<8x256xf32> to vector<1x1xf32>
    %7 = vector.shape_cast %4 : vector<1x256xf32> to vector<1x256xf32>
    %8 = vector.broadcast %7 : vector<1x256xf32> to vector<8x256xf32>
    %9 = vector.extract_strided_slice %0 {offsets = [0, 0], sizes = [8, 1], strides = [1, 1]} : vector<8x3xf32> to vector<8x1xf32>
    %10 = vector.extract_strided_slice %2 {offsets = [0, 0], sizes = [1, 256], strides = [1, 1]} : vector<8x256xf32> to vector<1x256xf32>
    %11 = vector.broadcast %9 : vector<8x1xf32> to vector<8x256xf32>
    %12 = vector.broadcast %10 : vector<1x256xf32> to vector<8x256xf32>
    %13 = arith.mulf %11, %12 : vector<8x256xf32>
    %14 = arith.addf %8, %13 : vector<8x256xf32>
    %15 = vector.extract_strided_slice %0 {offsets = [0, 1], sizes = [8, 1], strides = [1, 1]} : vector<8x3xf32> to vector<8x1xf32>
    %16 = vector.extract_strided_slice %2 {offsets = [1, 0], sizes = [1, 256], strides = [1, 1]} : vector<8x256xf32> to vector<1x256xf32>
    %17 = vector.broadcast %15 : vector<8x1xf32> to vector<8x256xf32>
    %18 = vector.broadcast %16 : vector<1x256xf32> to vector<8x256xf32>
    %19 = arith.mulf %17, %18 : vector<8x256xf32>
    %20 = arith.addf %14, %19 : vector<8x256xf32>
    %21 = vector.extract_strided_slice %0 {offsets = [0, 2], sizes = [8, 1], strides = [1, 1]} : vector<8x3xf32> to vector<8x1xf32>
    %22 = vector.extract_strided_slice %2 {offsets = [2, 0], sizes = [1, 256], strides = [1, 1]} : vector<8x256xf32> to vector<1x256xf32>
    %23 = vector.broadcast %21 : vector<8x1xf32> to vector<8x256xf32>
    %24 = vector.broadcast %22 : vector<1x256xf32> to vector<8x256xf32>
    %25 = arith.mulf %23, %24 : vector<8x256xf32>
    %26 = arith.addf %20, %25 : vector<8x256xf32>
    %27 = vector.extract_strided_slice %2 {offsets = [3, 0], sizes = [1, 256], strides = [1, 1]} : vector<8x256xf32> to vector<1x256xf32>
    %28 = vector.broadcast %1 : vector<8x1xf32> to vector<8x256xf32>
    %29 = vector.broadcast %27 : vector<1x256xf32> to vector<8x256xf32>
    %30 = arith.mulf %28, %29 : vector<8x256xf32>
    %31 = arith.addf %26, %30 : vector<8x256xf32>
    %cst = arith.constant 0.000000e+00 : f32
    %32 = vector.broadcast %cst : f32 to vector<8x256xf32>
    %33 = arith.maximumf %31, %32 : vector<8x256xf32>
    %34 = arith.truncf %33 : vector<8x256xf32> to vector<8x256xbf16>
    %c0_5 = arith.constant 0 : index
    %c0_6 = arith.constant 0 : index
    %35 = vector.load %arg3[%c0_5, %c0_6] : memref<256x256xbf16, #tpu.memory_space<vmem>>, vector<256x256xbf16>
    %cst_7 = arith.constant dense<0.000000e+00> : vector<8x256xf32>
    %36 = tpu.matmul %34, %35, %cst_7 {dimension_numbers = #tpu.dot_dimension_numbers<[1], [0], [0], [1], [0, 0, 1, 1], [], []>} : vector<8x256xbf16>, vector<256x256xbf16>, vector<8x256xf32> -> vector<8x256xf32>
    %37 = vector.broadcast %5 : vector<1x256xf32> to vector<8x256xf32>
    %38 = arith.addf %36, %37 : vector<8x256xf32>
    %cst_8 = arith.constant 0.000000e+00 : f32
    %39 = vector.broadcast %cst_8 : f32 to vector<8x256xf32>
    %40 = arith.maximumf %38, %39 : vector<8x256xf32>
    %41 = vector.broadcast %3 : vector<1x256xf32> to vector<8x256xf32>
    %42 = arith.mulf %40, %41 : vector<8x256xf32>
    %cst_9 = arith.constant dense<0.000000e+00> : vector<8xf32>
    %43 = vector.multi_reduction <add>, %42, %cst_9 [1] : vector<8x256xf32> to vector<8xf32>
    %44 = vector.shape_cast %43 : vector<8xf32> to vector<8x1xf32>
    %45 = vector.broadcast %6 : vector<1x1xf32> to vector<8x1xf32>
    %46 = arith.addf %44, %45 : vector<8x1xf32>
    %c0_10 = arith.constant 0 : index
    %c0_11 = arith.constant 0 : index
    %47 = vector.load %arg4[%c0_10, %c0_11] : memref<8x1xf32, #tpu.memory_space<vmem>>, vector<8x1xf32>
    tpu.vector_store %arg4[%c0_10, %c0_11], %46 {strides = array<i32>} : memref<8x1xf32, #tpu.memory_space<vmem>>, vector<8x1xf32>,
    return
  }
}

</mosaic_0001>

<llo_original>
// kernel: tpu_custom_call.1
$region0: #{tpu_custom_call.1}
  #allocation0 [shape = 'u32[]', space=smem, size = 0x4, offset = 0x4, fixed_abs, tag = 'smem constant byte address 0x4 - core index']
  #allocation1 [shape = 'u32[144,128]{1,0:T(1,128)}', space=vmem, size = 0x12000, scoped, tag = 'internal scratch']
  %s0 = inlined_call_operand.vmem [shape: f32[8,3], index: 0, kind: input, shape index: {}]
  %s1 = inlined_call_operand.vmem [shape: f32[8,1], index: 1, kind: input, shape index: {}]
  %s2 = inlined_call_operand.vmem [shape: f32[8,256], index: 2, kind: input, shape index: {}]
  %s3 = inlined_call_operand.hbm [shape: bf16[256,256], index: 3, kind: input, shape index: {}]
  %s4 = inlined_call_operand.vmem [shape: f32[8,1], index: 4, kind: output, shape index: {}]
  %s5 = sld [smem:[#allocation0]]
  $region30: #{tpu_custom_call.1} parent=0
    _
  %s7 = ssub.s32 1, %s5
  %s8 = scalar_select 0, %s7, %s5
  $region1: #{tpu_custom_call.1} parent=0
    #allocation2 [shape = 'u8[131072]{0}', space=vmem, size = 0x20000, scoped, tag = 'input window, operand 3, single buffered']
    #allocation3 [shape = 's32[1]{0}', space=sflag, size = 0x4, scoped, tag = 'scoped memory for tpu_custom_call.1']
    %9 = vsyncpa [#allocation3], 0
    // Predicated region
    $region2: #{tpu_custom_call.1} parent=1 // pred_check
      _
    $region3: #{tpu_custom_call.1} parent=1 // pred_check_branch
      %11 = sbr.rel (0) target = $region5
    $region4: #{tpu_custom_call.1} parent=1 // pred_region
      _
    $region5: #{tpu_custom_call.1} parent=1 // pred_fallthru
      _
    // Predicated region
    $region6: #{tpu_custom_call.1} parent=1 // pred_check
      _
    $region7: #{tpu_custom_call.1} parent=1 // pred_check_branch
      %13 = sbr.rel (0) target = $region9
    $region8: #{tpu_custom_call.1} parent=1 // pred_region
      _
    $region9: #{tpu_custom_call.1} parent=1 // pred_fallthru
      _
    // Predicated region
    $region10: #{tpu_custom_call.1} parent=1 // pred_check
      _
    $region11: #{tpu_custom_call.1} parent=1 // pred_check_branch
      %15 = sbr.rel (0) target = $region13
    $region12: #{tpu_custom_call.1} parent=1 // pred_region
      _
    $region13: #{tpu_custom_call.1} parent=1 // pred_fallthru
      _
    // Predicated region
    $region14: #{tpu_custom_call.1} parent=1 // pred_check
      _
    $region15: #{tpu_custom_call.1} parent=1 // pred_check_branch
      %17 = sbr.rel (0) target = $region17
    $region16: #{tpu_custom_call.1} parent=1 // pred_region
      %s19 = ssub.s32 4096, 4096
      %20 = vsyncadd [#allocation3], %s19
      %s21 = sshll.u32 [#allocation2], 4
      %s22 = int_to_ptr.vmem [resolvable:$true] %s21
      %27 = dma.hbm_to_vmem [thread:$0]  %s3, 4096, %s22, [#allocation3], 128, 128, 8
    $region17: #{tpu_custom_call.1} parent=1 // pred_fallthru
      _
    // Predicated region
    $region18: #{tpu_custom_call.1} parent=1 // pred_check
      _
    $region19: #{tpu_custom_call.1} parent=1 // pred_check_branch
      %29 = sbr.rel (0) target = $region21
    $region20: #{tpu_custom_call.1} parent=1 // pred_region
      %30 = dma.done [#allocation3], 4096
    $region21: #{tpu_custom_call.1} parent=1 // pred_fallthru
      _
    %v31 = vld [vmem:[%s0] sm:$0xff]
    %v32 = vld [vmem:[%s1] sm:$0xff]
    %v33 = vld [vmem:[%s2] sm:$0xff]
    %v34 = vld [vmem:[%s2 + $0x8] sm:$0xff]
    %v35 = vlaneseq
    %v36 = vshrl.u32 %v35, 7
    %v37 = vsub.s32 5, %v36
    %v38 = vrot.slane %v33, %v37
    %v39 = vlaneseq
    %v40 = vshrl.u32 %v39, 7
    %v41 = vsub.s32 5, %v40
    %v42 = vrot.slane %v34, %v41
    %44 = vset.pattern.permute.xlu0 0
    %45 = vperm.xlu0 %44, %v31
    %v46 = vpop.permute.xlu0 %45
    %v48 = vlaneseq
    %v49 = vshrl.u32 %v48, 7
    %v50 = vsub.s32 0, %v49
    %v51 = vrot.slane %v33, %v50
    %v52 = vlaneseq
    %v53 = vshrl.u32 %v52, 7
    %v54 = vsub.s32 0, %v53
    %v55 = vrot.slane %v34, %v54
    %v56 = vmul.f32 %v46, %v51
    %v57 = vmul.f32 %v46, %v55
    %v58 = vadd.f32 %v38, %v56
    %v59 = vadd.f32 %v42, %v57
    %60 = vset.pattern.permute.xlu0 1
    %61 = vperm.xlu0 %60, %v31
    %v62 = vpop.permute.xlu0 %61
    %v64 = vlaneseq
    %v65 = vshrl.u32 %v64, 7
    %v66 = vsub.s32 1, %v65
    %v67 = vrot.slane %v33, %v66
    %v68 = vlaneseq
    %v69 = vshrl.u32 %v68, 7
    %v70 = vsub.s32 1, %v69
    %v71 = vrot.slane %v34, %v70
    %v72 = vmul.f32 %v62, %v67
    %v73 = vmul.f32 %v62, %v71
    %v74 = vadd.f32 %v58, %v72
    %v75 = vadd.f32 %v59, %v73
    %76 = vset.pattern.permute.xlu0 2
    %77 = vperm.xlu0 %76, %v31
    %v78 = vpop.permute.xlu0 %77
    %v80 = vlaneseq
    %v81 = vshrl.u32 %v80, 7
    %v82 = vsub.s32 2, %v81
    %v83 = vrot.slane %v33, %v82
    %v84 = vlaneseq
    %v85 = vshrl.u32 %v84, 7
    %v86 = vsub.s32 2, %v85
    %v87 = vrot.slane %v34, %v86
    %v88 = vmul.f32 %v78, %v83
    %v89 = vmul.f32 %v78, %v87
    %v90 = vadd.f32 %v74, %v88
    %v91 = vadd.f32 %v75, %v89
    %93 = vset.pattern.permute.xlu0 0
    %94 = vperm.xlu0 %93, %v32
    %v95 = vpop.permute.xlu0 %94
    %v97 = vlaneseq
    %v98 = vshrl.u32 %v97, 7
    %v99 = vsub.s32 3, %v98
    %v100 = vrot.slane %v33, %v99
    %v101 = vlaneseq
    %v102 = vshrl.u32 %v101, 7
    %v103 = vsub.s32 3, %v102
    %v104 = vrot.slane %v34, %v103
    %v105 = vmul.f32 %v95, %v100
    %v106 = vmul.f32 %v95, %v104
    %v107 = vadd.f32 %v90, %v105
    %v108 = vadd.f32 %v91, %v106
    %v109 = vmax.f32 %v107, 0.0
    %v110 = vmax.f32 %v108, 0.0
    %v111 = vpack.c.bf16 %v109, %v109
    %v112 = vpack.c.bf16 %v110, %v110
    %v113 = vld [vmem:[#allocation2] sm:$0xff]
    %v114 = vld [vmem:[#allocation2 + $0x8] sm:$0xff]
    %v115 = vld [vmem:[#allocation2 + $0x10] sm:$0xff]
    %v116 = vld [vmem:[#allocation2 + $0x18] sm:$0xff]
    %v117 = vld [vmem:[#allocation2 + $0x20] sm:$0xff]
    %v118 = vld [vmem:[#allocation2 + $0x28] sm:$0xff]
    %v119 = vld [vmem:[#allocation2 + $0x30] sm:$0xff]
    %v120 = vld [vmem:[#allocation2 + $0x38] sm:$0xff]
    %v121 = vld [vmem:[#allocation2 + $0x40] sm:$0xff]
    %v122 = vld [vmem:[#allocation2 + $0x48] sm:$0xff]
    %v123 = vld [vmem:[#allocation2 + $0x50] sm:$0xff]
    %v124 = vld [vmem:[#allocation2 + $0x58] sm:$0xff]
    %v125 = vld [vmem:[#allocation2 + $0x60] sm:$0xff]
    %v126 = vld [vmem:[#allocation2 + $0x68] sm:$0xff]
    %v127 = vld [vmem:[#allocation2 + $0x70] sm:$0xff]
    %v128 = vld [vmem:[#allocation2 + $0x78] sm:$0xff]
    %v129 = vld [vmem:[#allocation2 + $0x80] sm:$0xff]
    %v130 = vld [vmem:[#allocation2 + $0x88] sm:$0xff]
    %v131 = vld [vmem:[#allocation2 + $0x90] sm:$0xff]
    %v132 = vld [vmem:[#allocation2 + $0x98] sm:$0xff]
    %v133 = vld [vmem:[#allocation2 + $0xa0] sm:$0xff]
    %v134 = vld [vmem:[#allocation2 + $0xa8] sm:$0xff]
    %v135 = vld [vmem:[#allocation2 + $0xb0] sm:$0xff]
    %v136 = vld [vmem:[#allocation2 + $0xb8] sm:$0xff]
    %v137 = vld [vmem:[#allocation2 + $0xc0] sm:$0xff]
    %v138 = vld [vmem:[#allocation2 + $0xc8] sm:$0xff]
    %v139 = vld [vmem:[#allocation2 + $0xd0] sm:$0xff]
    %v140 = vld [vmem:[#allocation2 + $0xd8] sm:$0xff]
    %v141 = vld [vmem:[#allocation2 + $0xe0] sm:$0xff]
    %v142 = vld [vmem:[#allocation2 + $0xe8] sm:$0xff]
    %v143 = vld [vmem:[#allocation2 + $0xf0] sm:$0xff]
    %v144 = vld [vmem:[#allocation2 + $0xf8] sm:$0xff]
    %v145 = vlaneseq
    %v146 = vshrl.u32 %v145, 7
    %v147 = vsub.s32 6, %v146
    %v148 = vrot.slane %v33, %v147
    %v149 = vlaneseq
    %v150 = vshrl.u32 %v149, 7
    %v151 = vsub.s32 6, %v150
    %v152 = vrot.slane %v34, %v151
    %v185 = vunpack.c.l.b16 %v113
    %v186 = vunpack.c.h.b16 %v113
    %v187 = vunpack.c.l.b16 %v114
    %v188 = vunpack.c.h.b16 %v114
    %v189 = vunpack.c.l.b16 %v115
    %v190 = vunpack.c.h.b16 %v115
    %v191 = vunpack.c.l.b16 %v116
    %v192 = vunpack.c.h.b16 %v116
    %v193 = vunpack.c.l.b16 %v117
    %v194 = vunpack.c.h.b16 %v117
    %v195 = vunpack.c.l.b16 %v118
    %v196 = vunpack.c.h.b16 %v118
    %v197 = vunpack.c.l.b16 %v119
    %v198 = vunpack.c.h.b16 %v119
    %v199 = vunpack.c.l.b16 %v120
    %v200 = vunpack.c.h.b16 %v120
    %v201 = vunpack.c.l.b16 %v121
    %v202 = vunpack.c.h.b16 %v121
    %v203 = vunpack.c.l.b16 %v122
    %v204 = vunpack.c.h.b16 %v122
    %v205 = vunpack.c.l.b16 %v123
    %v206 = vunpack.c.h.b16 %v123
    %v207 = vunpack.c.l.b16 %v124
    %v208 = vunpack.c.h.b16 %v124
    %v209 = vunpack.c.l.b16 %v125
    %v210 = vunpack.c.h.b16 %v125
    %v211 = vunpack.c.l.b16 %v126
    %v212 = vunpack.c.h.b16 %v126
    %v213 = vunpack.c.l.b16 %v127
    %v214 = vunpack.c.h.b16 %v127
    %v215 = vunpack.c.l.b16 %v128
    %v216 = vunpack.c.h.b16 %v128
    %v217 = vunpack.c.l.b16 %v129
    %v218 = vunpack.c.h.b16 %v129
    %v219 = vunpack.c.l.b16 %v130
    %v220 = vunpack.c.h.b16 %v130
    %v221 = vunpack.c.l.b16 %v131
    %v222 = vunpack.c.h.b16 %v131
    %v223 = vunpack.c.l.b16 %v132
    %v224 = vunpack.c.h.b16 %v132
    %v225 = vunpack.c.l.b16 %v133
    %v226 = vunpack.c.h.b16 %v133
    %v227 = vunpack.c.l.b16 %v134
    %v228 = vunpack.c.h.b16 %v134
    %v229 = vunpack.c.l.b16 %v135
    %v230 = vunpack.c.h.b16 %v135
    %v231 = vunpack.c.l.b16 %v136
    %v232 = vunpack.c.h.b16 %v136
    %v233 = vunpack.c.l.b16 %v137
    %v234 = vunpack.c.h.b16 %v137
    %v235 = vunpack.c.l.b16 %v138
    %v236 = vunpack.c.h.b16 %v138
    %v237 = vunpack.c.l.b16 %v139
    %v238 = vunpack.c.h.b16 %v139
    %v239 = vunpack.c.l.b16 %v140
    %v240 = vunpack.c.h.b16 %v140
    %v241 = vunpack.c.l.b16 %v141
    %v242 = vunpack.c.h.b16 %v141
    %v243 = vunpack.c.l.b16 %v142
    %v244 = vunpack.c.h.b16 %v142
    %v245 = vunpack.c.l.b16 %v143
    %v246 = vunpack.c.h.b16 %v143
    %v247 = vunpack.c.l.b16 %v144
    %v248 = vunpack.c.h.b16 %v144
    %v249 = vpack.c.b16 %v187, %v185
    %v250 = vpack.c.b16 %v188, %v186
    %v251 = vpack.c.b16 %v191, %v189
    %v252 = vpack.c.b16 %v192, %v190
    %v253 = vpack.c.b16 %v195, %v193
    %v254 = vpack.c.b16 %v196, %v194
    %v255 = vpack.c.b16 %v199, %v197
    %v256 = vpack.c.b16 %v200, %v198
    %v257 = vpack.c.b16 %v203, %v201
    %v258 = vpack.c.b16 %v204, %v202
    %v259 = vpack.c.b16 %v207, %v205
    %v260 = vpack.c.b16 %v208, %v206
    %v261 = vpack.c.b16 %v211, %v209
    %v262 = vpack.c.b16 %v212, %v210
    %v263 = vpack.c.b16 %v215, %v213
    %v264 = vpack.c.b16 %v216, %v214
    %v265 = vpack.c.b16 %v219, %v217
    %v266 = vpack.c.b16 %v220, %v218
    %v267 = vpack.c.b16 %v223, %v221
    %v268 = vpack.c.b16 %v224, %v222
    %v269 = vpack.c.b16 %v227, %v225
    %v270 = vpack.c.b16 %v228, %v226
    %v271 = vpack.c.b16 %v231, %v229
    %v272 = vpack.c.b16 %v232, %v230
    %v273 = vpack.c.b16 %v235, %v233
    %v274 = vpack.c.b16 %v236, %v234
    %v275 = vpack.c.b16 %v239, %v237
    %v276 = vpack.c.b16 %v240, %v238
    %v277 = vpack.c.b16 %v243, %v241
    %v278 = vpack.c.b16 %v244, %v242
    %v279 = vpack.c.b16 %v247, %v245
    %v280 = vpack.c.b16 %v248, %v246
    %313 = vmatprep.subr.bf16.mxu0 %v250
    %314 = vmatpush1.bf16.msra.mxu0 %v249
    %315 = vmatprep.subr.bf16.mxu0 %v252
    %316 = vmatpush1.bf16.msra.mxu0 %v251
    %317 = vmatprep.subr.bf16.mxu0 %v254
    %318 = vmatpush1.bf16.msra.mxu0 %v253
    %319 = vmatprep.subr.bf16.mxu0 %v256
    %320 = vmatpush1.bf16.msra.mxu0 %v255
    %321 = vmatprep.subr.bf16.mxu0 %v258
    %322 = vmatpush1.bf16.msra.mxu0 %v257
    %323 = vmatprep.subr.bf16.mxu0 %v260
    %324 = vmatpush1.bf16.msra.mxu0 %v259
    %325 = vmatprep.subr.bf16.mxu0 %v262
    %326 = vmatpush1.bf16.msra.mxu0 %v261
    %327 = vmatprep.subr.bf16.mxu0 %v264
    %328 = vmatpush1.bf16.msra.mxu0 %v263
    %329 = vmatprep.subr.bf16.mxu0 %v266
    %330 = vmatpush1.bf16.msra.mxu0 %v265
    %331 = vmatprep.subr.bf16.mxu0 %v268
    %332 = vmatpush1.bf16.msra.mxu0 %v267
    %333 = vmatprep.subr.bf16.mxu0 %v270
    %334 = vmatpush1.bf16.msra.mxu0 %v269
    %335 = vmatprep.subr.bf16.mxu0 %v272
    %336 = vmatpush1.bf16.msra.mxu0 %v271
    %337 = vmatprep.subr.bf16.mxu0 %v274
    %338 = vmatpush1.bf16.msra.mxu0 %v273
    %339 = vmatprep.subr.bf16.mxu0 %v276
    %340 = vmatpush1.bf16.msra.mxu0 %v275
    %341 = vmatprep.subr.bf16.mxu0 %v278
    %342 = vmatpush1.bf16.msra.mxu0 %v277
    %343 = vmatprep.subr.bf16.mxu0 %v280
    %344 = vmatpush1.bf16.msra.mxu0 %v279
    %345 = vmatprep.mubr.bf16.mxu0 %v112
    %346 = vmatmul.mubr.bf16.gmra.mrb[0].mxu0 %v111
    %v347 = vpop.f32.mrb[0].mxu0
    %v348 = vadd.f32 %v148, %v347
    %v349 = vpop.f32.mrb[0].mxu0
    %v350 = vadd.f32 %v152, %v349
    %v351 = vpop.f32.mrb[0].mxu0
    %v352 = vpop.f32.mrb[0].mxu0
    %353 = vdwg.mxu0
    %v354 = vmax.f32 %v348, 0.0
    %v355 = vmax.f32 %v350, 0.0
    %v356 = vlaneseq
    %v357 = vshrl.u32 %v356, 7
    %v358 = vsub.s32 4, %v357
    %v359 = vrot.slane %v33, %v358
    %v360 = vlaneseq
    %v361 = vshrl.u32 %v360, 7
    %v362 = vsub.s32 4, %v361
    %v363 = vrot.slane %v34, %v362
    %v364 = vmul.f32 %v354, %v359
    %v365 = vmul.f32 %v355, %v363
    %v366 = vadd.f32 %v364, %v365
    %367 = vadd.xlane.f32.xlu0 %v366
    %v368 = vpop.xlane.xlu0 %367
    %v369 = vlaneseq
    %v370 = vshrl.u32 %v369, 7
    %v371 = vsub.s32 7, %v370
    %v372 = vrot.slane %v33, %v371
    %v373 = vadd.f32 %v368, %v372
    %vm374 = vcmask 7168
    %375 = vst.msk [vmem:[%s4] sm:$0xff] %vm374, %v373
    // Predicated region
    $region22: #{tpu_custom_call.1} parent=1 // pred_check
      _
    $region23: #{tpu_custom_call.1} parent=1 // pred_check_branch
      %377 = sbr.rel (0) target = $region25
    $region24: #{tpu_custom_call.1} parent=1 // pred_region
      _
    $region25: #{tpu_custom_call.1} parent=1 // pred_fallthru
      _
    // Predicated region
    $region26: #{tpu_custom_call.1} parent=1 // pred_check
      _
    $region27: #{tpu_custom_call.1} parent=1 // pred_check_branch
      %379 = sbr.rel (0) target = $region29
    $region28: #{tpu_custom_call.1} parent=1 // pred_region
      _
    $region29: #{tpu_custom_call.1} parent=1 // pred_fallthru
      _
    %380 = vsyncpa [#allocation3], 1

</llo_original>
